<compile_context>
chip_gen: v6e
topology: v6e:2x2x1
jax: 0.10.0
libtpu: 0.0.40
codegen_flags: <defaults>
</compile_context>

<pallas_src>
import functools

import jax
import jax.numpy as jnp
from jax.experimental import pallas as pl
from jax.experimental.pallas import tpu as pltpu


def _round_up(v, m):
    return ((v + m - 1) // m) * m


def _pair(v):
    return (v, v) if isinstance(v, int) else tuple(v)


def _conv_bn_relu_kernel(x_ref, w_ref, shift_ref, o_ref, patch_ref, *,
                         cin_pad, kh, kw, sh, sw, wph, ho, band_rows):
    # x_ref     : (n_phase*cin_pad, Lp)  bf16  phase-decomposed padded image,
    #                                          flattened spatial axis on lanes
    # w_ref     : (Cout, K)              bf16  BN-scale-folded weight, K=kh*kw*cin_pad
    # shift_ref : (Cout, 1)              f32   beta - running_mean * scale
    # o_ref     : (Cout, Ho*Wph)               lane-dense channel-major output
    # patch_ref : (K, band_rows*Wph)     bf16  VMEM scratch (local im2col)
    n_bands = (ho + band_rows - 1) // band_rows
    for b in range(n_bands):                       # static, unrolled band loop
        r0 = b * band_rows
        rows = min(band_rows, ho - r0)
        m0 = r0 * wph
        mband = rows * wph
        # ---- local im2col: each tap is a contiguous lane-slice copy into the
        #      scratch (no reshape, no relayout; sublane offsets 8-aligned).
        for dy in range(kh):
            for dx in range(kw):
                t = dy * kw + dx
                phase = (dy % sh) * sw + (dx % sw)
                off = (dy // sh) * wph + (dx // sw)
                patch_ref[pl.ds(t * cin_pad, cin_pad), pl.ds(0, mband)] = (
                    x_ref[pl.ds(phase * cin_pad, cin_pad),
                          pl.ds(m0 + off, mband)])
        # ---- ONE fused-K MXU matmul -> lane-dense (Cout, mband) f32 acc.
        acc = jnp.dot(w_ref[...], patch_ref[:, pl.ds(0, mband)],
                      preferred_element_type=jnp.float32)
        y = jnp.maximum(acc + shift_ref[...], 0.0)
        o_ref[:, pl.ds(m0, mband)] = y.astype(o_ref.dtype)


@functools.partial(jax.jit, static_argnames=("stride", "padding"))
def basic_conv2d(x_nchw, weight, gamma, beta, running_mean, running_var,
                 stride=(1, 1), padding=(0, 0)):
    """Conv2d(bias=False) + BatchNorm2d(eps=1e-3, eval) + ReLU.  NCHW in/out."""
    eps = 1e-3
    sh, sw = _pair(stride)
    ph, pw = _pair(padding)
    n, cin, h, w = x_nchw.shape
    cout, _, kh, kw = weight.shape

    hp, wp = h + 2 * ph, w + 2 * pw
    ho = (hp - kh) // sh + 1
    wo = (wp - kw) // sw + 1
    # Phase (space-to-batch) decomposition: a stride-s conv becomes stride-1
    # taps over sh*sw sub-sampled planes -> one kernel path for all strides.
    hph = -(-hp // sh)
    wph = -(-wp // sw)
    n_phase = sh * sw
    cin_pad = _round_up(cin, 8)              # sublane-aligned tap rows
    k_dim = kh * kw * cin_pad
    qy_max = (kh - 1) // sh
    qx_max = (kw - 1) // sw
    m_total = ho * wph                        # flat outputs (cols >= wo are junk)
    need = (ho + qy_max) * wph + qx_max       # largest flat index read + 1
    lp = _round_up(max(need, hph * wph), 128)

    # --- input prep (single cheap XLA pass): NCHW -> zero-pad, phase split,
    #     channel pad, flatten to (N, n_phase*cin_pad, Lp), cast bf16.
    xp = jnp.pad(x_nchw, ((0, 0), (0, cin_pad - cin),
                          (ph, hph * sh - h - ph), (pw, wph * sw - w - pw)))
    xp = xp.reshape(n, cin_pad, hph, sh, wph, sw)
    xp = jnp.transpose(xp, (0, 3, 5, 1, 2, 4))       # (N, sh, sw, C, Hph, Wph)
    xp = xp.reshape(n, n_phase * cin_pad, hph * wph)
    xp = jnp.pad(xp, ((0, 0), (0, 0), (0, lp - hph * wph))).astype(jnp.bfloat16)

    # --- weights: fold BN scale in f32, then cast the product to bf16.
    scale = gamma / jnp.sqrt(running_var + eps)                      # (Cout,)
    shift = (beta - running_mean * scale).reshape(cout, 1).astype(jnp.float32)
    w_f32 = weight * scale[:, None, None, None]                      # (Cout,Cin,kh,kw)
    w_f32 = jnp.transpose(w_f32, (0, 2, 3, 1))                       # (Cout,kh,kw,Cin)
    w_f32 = jnp.pad(w_f32, ((0, 0), (0, 0), (0, 0), (0, cin_pad - cin)))
    w_mat = w_f32.reshape(cout, k_dim).astype(jnp.bfloat16)

    # --- row-band size: keep the im2col patch (<~4 MiB) and the f32
    #     accumulator (<~1 MiB) small; K is already fused into one matmul.
    m_cap = max(wph, min(4096, (4 << 20) // (2 * k_dim), (1 << 20) // (4 * cout)))
    band_rows = max(1, min(ho, m_cap // wph))
    m_band = band_rows * wph

    out_dtype = x_nchw.dtype
    # --- explicit VMEM budget (tight scoped defaults: v5e 16 MiB, v7x 32 MiB).
    est = (2 * n_phase * cin_pad * lp * 2                         # input, 2x buffered
           + cout * k_dim * 2                                     # weights
           + 2 * cout * m_total * jnp.dtype(out_dtype).itemsize   # output, 2x buffered
           + k_dim * m_band * 2                                   # im2col scratch
           + cout * m_band * 4                                    # accumulator
           + (2 << 20))
    vmem_limit = int(min(56 << 20, max(16 << 20, 2 * est)))

    kernel = functools.partial(
        _conv_bn_relu_kernel, cin_pad=cin_pad, kh=kh, kw=kw, sh=sh, sw=sw,
        wph=wph, ho=ho, band_rows=band_rows)

    out_flat = pl.pallas_call(
        kernel,
        out_shape=jax.ShapeDtypeStruct((n, cout, m_total), out_dtype),
        grid_spec=pltpu.PrefetchScalarGridSpec(
            num_scalar_prefetch=0,
            grid=(n,),
            in_specs=[
                pl.BlockSpec((None, n_phase * cin_pad, lp), lambda i: (i, 0, 0)),
                pl.BlockSpec((cout, k_dim), lambda i: (0, 0)),
                pl.BlockSpec((cout, 1), lambda i: (0, 0)),
            ],
            out_specs=pl.BlockSpec((None, cout, m_total), lambda i: (i, 0, 0)),
            scratch_shapes=[pltpu.VMEM((k_dim, m_band), jnp.bfloat16)],
        ),
        compiler_params=pltpu.CompilerParams(
            dimension_semantics=("parallel",),
            vmem_limit_bytes=vmem_limit),
    )(xp, w_mat, shift)

    # Lane-dense flat output -> NCHW: reshape + drop the (kw-1)/alignment
    # garbage columns.  No transpose pass.
    return out_flat.reshape(n, cout, ho, wph)[:, :, :, :wo]


if __name__ == "__main__":
    # BasicConv2d(4, 8, kernel_size=3, padding=1) on a (2, 4, 16, 16) input.
    N, Cin, H, W = 2, 4, 16, 16
    Cout, KH, KW = 8, 3, 3

    key = jax.random.PRNGKey(0)
    k_x, k_w, k_g, k_b, k_m, k_v = jax.random.split(key, 6)

    x = jax.random.normal(k_x, (N, Cin, H, W), dtype=jnp.float32)
    weight = jax.random.normal(k_w, (Cout, Cin, KH, KW), dtype=jnp.float32) * 0.1
    gamma = 1.0 + 0.1 * jax.random.normal(k_g, (Cout,), dtype=jnp.float32)
    beta = 0.1 * jax.random.normal(k_b, (Cout,), dtype=jnp.float32)
    running_mean = 0.1 * jax.random.normal(k_m, (Cout,), dtype=jnp.float32)
    running_var = jnp.abs(jax.random.normal(k_v, (Cout,), dtype=jnp.float32)) + 0.5

    scale = gamma / jnp.sqrt(running_var + 1e-3)
    shift = beta - running_mean * scale

    # ---- stride 1, padding 1 (the standard BasicConv2d 3x3).
    out = basic_conv2d(x, weight, gamma, beta, running_mean, running_var,
                       stride=(1, 1), padding=(1, 1))
    jax.block_until_ready(out)
    ref_conv = jax.lax.conv_general_dilated(
        x, weight, window_strides=(1, 1), padding=((1, 1), (1, 1)),
        dimension_numbers=("NCHW", "OIHW", "NCHW"))
    ref = jnp.maximum(ref_conv * scale[None, :, None, None]
                      + shift[None, :, None, None], 0.0)
    assert out.shape == (N, Cout, H, W)
    err = float(jnp.max(jnp.abs(out - ref)))
    # bf16 MXU operands vs. a pure-f32 reference -> loosened tolerance.
    assert jnp.allclose(out, ref, atol=5e-2, rtol=5e-2), err

    # ---- stride 2, padding 0 (Inception stem style) — validates the phase
    #      decomposition path against lax.conv.
    out_s2 = basic_conv2d(x, weight, gamma, beta, running_mean, running_var,
                          stride=(2, 2), padding=(0, 0))
    jax.block_until_ready(out_s2)
    ref_conv2 = jax.lax.conv_general_dilated(
        x, weight, window_strides=(2, 2), padding=((0, 0), (0, 0)),
        dimension_numbers=("NCHW", "OIHW", "NCHW"))
    ref2 = jnp.maximum(ref_conv2 * scale[None, :, None, None]
                       + shift[None, :, None, None], 0.0)
    assert out_s2.shape == ref2.shape
    err2 = float(jnp.max(jnp.abs(out_s2 - ref2)))
    assert jnp.allclose(out_s2, ref2, atol=5e-2, rtol=5e-2), err2

    print("KERNEL_OK")
</pallas_src>

<mosaic_0001>
module attributes {stable_mosaic.version = 11 : i64} {
  func.func @_conv_bn_relu_kernel(%arg0: i32, %arg1: memref<1x8x384xbf16, #tpu.memory_space<vmem>>, %arg2: memref<8x72xbf16, #tpu.memory_space<vmem>>, %arg3: memref<8x1xf32, #tpu.memory_space<vmem>>, %arg4: memref<1x8x288xf32, #tpu.memory_space<vmem>>, %arg5: memref<72x288xbf16, #tpu.memory_space<vmem>>) attributes {dimension_semantics = [#tpu.dimension_semantics<parallel>], iteration_bounds = array<i64: 2>, scalar_prefetch = 0 : i64, scratch_operands = 1 : i64, tpu.core_type = #tpu.core_type<tc>, window_params = [{transform_indices = @transform_0, window_bounds = array<i64: 1, 8, 384>}, {pipeline_mode = #tpu.pipeline_mode<synchronous>, transform_indices = @transform_1, window_bounds = array<i64: 8, 72>}, {pipeline_mode = #tpu.pipeline_mode<synchronous>, transform_indices = @transform_2, window_bounds = array<i64: 8, 1>}, {transform_indices = @transform_3, window_bounds = array<i64: 1, 8, 288>}]} {
    %c0 = arith.constant 0 : index
    %c0_0 = arith.constant 0 : index
    %c0_1 = arith.constant 0 : index
    %0 = vector.load %arg1[%c0, %c0_0, %c0_1] : memref<1x8x384xbf16, #tpu.memory_space<vmem>>, vector<1x8x288xbf16>
    %1 = vector.shape_cast %0 : vector<1x8x288xbf16> to vector<8x288xbf16>
    %c0_2 = arith.constant 0 : index
    %c0_3 = arith.constant 0 : index
    %2 = vector.load %arg5[%c0_2, %c0_3] : memref<72x288xbf16, #tpu.memory_space<vmem>>, vector<8x288xbf16>
    tpu.vector_store %arg5[%c0_2, %c0_3], %1 {strides = array<i32>} : memref<72x288xbf16, #tpu.memory_space<vmem>>, vector<8x288xbf16>,
    %c0_4 = arith.constant 0 : index
    %c0_5 = arith.constant 0 : index
    %c1 = arith.constant 1 : index
    %3 = vector.load %arg1[%c0_4, %c0_5, %c1] : memref<1x8x384xbf16, #tpu.memory_space<vmem>>, vector<1x8x288xbf16>
    %4 = vector.shape_cast %3 : vector<1x8x288xbf16> to vector<8x288xbf16>
    %c8 = arith.constant 8 : index
    %c0_6 = arith.constant 0 : index
    %5 = vector.load %arg5[%c8, %c0_6] : memref<72x288xbf16, #tpu.memory_space<vmem>>, vector<8x288xbf16>
    tpu.vector_store %arg5[%c8, %c0_6], %4 {strides = array<i32>} : memref<72x288xbf16, #tpu.memory_space<vmem>>, vector<8x288xbf16>,
    %c0_7 = arith.constant 0 : index
    %c0_8 = arith.constant 0 : index
    %c2 = arith.constant 2 : index
    %6 = vector.load %arg1[%c0_7, %c0_8, %c2] : memref<1x8x384xbf16, #tpu.memory_space<vmem>>, vector<1x8x288xbf16>
    %7 = vector.shape_cast %6 : vector<1x8x288xbf16> to vector<8x288xbf16>
    %c16 = arith.constant 16 : index
    %c0_9 = arith.constant 0 : index
    %8 = vector.load %arg5[%c16, %c0_9] : memref<72x288xbf16, #tpu.memory_space<vmem>>, vector<8x288xbf16>
    tpu.vector_store %arg5[%c16, %c0_9], %7 {strides = array<i32>} : memref<72x288xbf16, #tpu.memory_space<vmem>>, vector<8x288xbf16>,
    %c0_10 = arith.constant 0 : index
    %c0_11 = arith.constant 0 : index
    %c18 = arith.constant 18 : index
    %9 = vector.load %arg1[%c0_10, %c0_11, %c18] : memref<1x8x384xbf16, #tpu.memory_space<vmem>>, vector<1x8x288xbf16>
    %10 = vector.shape_cast %9 : vector<1x8x288xbf16> to vector<8x288xbf16>
    %c24 = arith.constant 24 : index
    %c0_12 = arith.constant 0 : index
    %11 = vector.load %arg5[%c24, %c0_12] : memref<72x288xbf16, #tpu.memory_space<vmem>>, vector<8x288xbf16>
    tpu.vector_store %arg5[%c24, %c0_12], %10 {strides = array<i32>} : memref<72x288xbf16, #tpu.memory_space<vmem>>, vector<8x288xbf16>,
    %c0_13 = arith.constant 0 : index
    %c0_14 = arith.constant 0 : index
    %c19 = arith.constant 19 : index
    %12 = vector.load %arg1[%c0_13, %c0_14, %c19] : memref<1x8x384xbf16, #tpu.memory_space<vmem>>, vector<1x8x288xbf16>
    %13 = vector.shape_cast %12 : vector<1x8x288xbf16> to vector<8x288xbf16>
    %c32 = arith.constant 32 : index
    %c0_15 = arith.constant 0 : index
    %14 = vector.load %arg5[%c32, %c0_15] : memref<72x288xbf16, #tpu.memory_space<vmem>>, vector<8x288xbf16>
    tpu.vector_store %arg5[%c32, %c0_15], %13 {strides = array<i32>} : memref<72x288xbf16, #tpu.memory_space<vmem>>, vector<8x288xbf16>,
    %c0_16 = arith.constant 0 : index
    %c0_17 = arith.constant 0 : index
    %c20 = arith.constant 20 : index
    %15 = vector.load %arg1[%c0_16, %c0_17, %c20] : memref<1x8x384xbf16, #tpu.memory_space<vmem>>, vector<1x8x288xbf16>
    %16 = vector.shape_cast %15 : vector<1x8x288xbf16> to vector<8x288xbf16>
    %c40 = arith.constant 40 : index
    %c0_18 = arith.constant 0 : index
    %17 = vector.load %arg5[%c40, %c0_18] : memref<72x288xbf16, #tpu.memory_space<vmem>>, vector<8x288xbf16>
    tpu.vector_store %arg5[%c40, %c0_18], %16 {strides = array<i32>} : memref<72x288xbf16, #tpu.memory_space<vmem>>, vector<8x288xbf16>,
    %c0_19 = arith.constant 0 : index
    %c0_20 = arith.constant 0 : index
    %c36 = arith.constant 36 : index
    %18 = vector.load %arg1[%c0_19, %c0_20, %c36] : memref<1x8x384xbf16, #tpu.memory_space<vmem>>, vector<1x8x288xbf16>
    %19 = vector.shape_cast %18 : vector<1x8x288xbf16> to vector<8x288xbf16>
    %c48 = arith.constant 48 : index
    %c0_21 = arith.constant 0 : index
    %20 = vector.load %arg5[%c48, %c0_21] : memref<72x288xbf16, #tpu.memory_space<vmem>>, vector<8x288xbf16>
    tpu.vector_store %arg5[%c48, %c0_21], %19 {strides = array<i32>} : memref<72x288xbf16, #tpu.memory_space<vmem>>, vector<8x288xbf16>,
    %c0_22 = arith.constant 0 : index
    %c0_23 = arith.constant 0 : index
    %c37 = arith.constant 37 : index
    %21 = vector.load %arg1[%c0_22, %c0_23, %c37] : memref<1x8x384xbf16, #tpu.memory_space<vmem>>, vector<1x8x288xbf16>
    %22 = vector.shape_cast %21 : vector<1x8x288xbf16> to vector<8x288xbf16>
    %c56 = arith.constant 56 : index
    %c0_24 = arith.constant 0 : index
    %23 = vector.load %arg5[%c56, %c0_24] : memref<72x288xbf16, #tpu.memory_space<vmem>>, vector<8x288xbf16>
    tpu.vector_store %arg5[%c56, %c0_24], %22 {strides = array<i32>} : memref<72x288xbf16, #tpu.memory_space<vmem>>, vector<8x288xbf16>,
    %c0_25 = arith.constant 0 : index
    %c0_26 = arith.constant 0 : index
    %c38 = arith.constant 38 : index
    %24 = vector.load %arg1[%c0_25, %c0_26, %c38] : memref<1x8x384xbf16, #tpu.memory_space<vmem>>, vector<1x8x288xbf16>
    %25 = vector.shape_cast %24 : vector<1x8x288xbf16> to vector<8x288xbf16>
    %c64 = arith.constant 64 : index
    %c0_27 = arith.constant 0 : index
    %26 = vector.load %arg5[%c64, %c0_27] : memref<72x288xbf16, #tpu.memory_space<vmem>>, vector<8x288xbf16>
    tpu.vector_store %arg5[%c64, %c0_27], %25 {strides = array<i32>} : memref<72x288xbf16, #tpu.memory_space<vmem>>, vector<8x288xbf16>,
    %c0_28 = arith.constant 0 : index
    %c0_29 = arith.constant 0 : index
    %27 = vector.load %arg2[%c0_28, %c0_29] : memref<8x72xbf16, #tpu.memory_space<vmem>>, vector<8x72xbf16>
    %c0_30 = arith.constant 0 : index
    %c0_31 = arith.constant 0 : index
    %28 = vector.load %arg5[%c0_30, %c0_31] : memref<72x288xbf16, #tpu.memory_space<vmem>>, vector<72x288xbf16>
    %cst = arith.constant dense<0.000000e+00> : vector<8x288xf32>
    %29 = tpu.matmul %27, %28, %cst {dimension_numbers = #tpu.dot_dimension_numbers<[1], [0], [0], [1], [0, 0, 1, 1], [], []>} : vector<8x72xbf16>, vector<72x288xbf16>, vector<8x288xf32> -> vector<8x288xf32>
    %c0_32 = arith.constant 0 : index
    %c0_33 = arith.constant 0 : index
    %30 = vector.load %arg3[%c0_32, %c0_33] : memref<8x1xf32, #tpu.memory_space<vmem>>, vector<8x1xf32>
    %31 = vector.broadcast %30 : vector<8x1xf32> to vector<8x288xf32>
    %32 = arith.addf %29, %31 : vector<8x288xf32>
    %cst_34 = arith.constant 0.000000e+00 : f32
    %33 = vector.broadcast %cst_34 : f32 to vector<8x288xf32>
    %34 = arith.maximumf %32, %33 : vector<8x288xf32>
    %c0_35 = arith.constant 0 : index
    %c0_36 = arith.constant 0 : index
    %c0_37 = arith.constant 0 : index
    %35 = vector.load %arg4[%c0_35, %c0_36, %c0_37] : memref<1x8x288xf32, #tpu.memory_space<vmem>>, vector<1x8x288xf32>
    %36 = vector.shape_cast %35 : vector<1x8x288xf32> to vector<8x288xf32>
    %37 = vector.shape_cast %34 : vector<8x288xf32> to vector<1x8x288xf32>
    tpu.vector_store %arg4[%c0_35, %c0_36, %c0_37], %37 {strides = array<i32>} : memref<1x8x288xf32, #tpu.memory_space<vmem>>, vector<1x8x288xf32>,
    return
  }
  func.func @transform_0(%arg0: i32) -> (i32, i32, i32) {
    %c0_i32 = arith.constant 0 : i32
    %c0_i32_0 = arith.constant 0 : i32
    %c0_i32_1 = arith.constant 0 : i32
    return %arg0, %c0_i32, %c0_i32_0 : i32, i32, i32
  }
  func.func @transform_1(%arg0: i32) -> (i32, i32) {
    %c0_i32 = arith.constant 0 : i32
    %c0_i32_0 = arith.constant 0 : i32
    %c0_i32_1 = arith.constant 0 : i32
    return %c0_i32, %c0_i32_0 : i32, i32
  }
  func.func @transform_2(%arg0: i32) -> (i32, i32) {
    %c0_i32 = arith.constant 0 : i32
    %c0_i32_0 = arith.constant 0 : i32
    %c0_i32_1 = arith.constant 0 : i32
    return %c0_i32, %c0_i32_0 : i32, i32
  }
  func.func @transform_3(%arg0: i32) -> (i32, i32, i32) {
    %c0_i32 = arith.constant 0 : i32
    %c0_i32_0 = arith.constant 0 : i32
    %c0_i32_1 = arith.constant 0 : i32
    return %arg0, %c0_i32, %c0_i32_0 : i32, i32, i32
  }
}

</mosaic_0001>

<llo_original>
// kernel: basic_conv2d.1
$region0: #{basic_conv2d.1}
  #allocation0 [shape = 'u32[]', space=smem, size = 0x4, offset = 0x4, fixed_abs, tag = 'smem constant byte address 0x4 - core index']
  #allocation1 [shape = 'u32[144,128]{1,0:T(1,128)}', space=vmem, size = 0x12000, scoped, tag = 'internal scratch']
  #allocation2 [shape = 'bf16[72,288]{1,0:T(8,128)(2,1)}', space=vmem, size = 0xd800, scoped, tag = 'scratch operand']
  %s0 = inlined_call_operand.vmem [shape: bf16[2,8,384], index: 0, kind: input, shape index: {}]
  %s1 = inlined_call_operand.vmem [shape: bf16[8,72], index: 1, kind: input, shape index: {}]
  %s2 = inlined_call_operand.vmem [shape: f32[8,1], index: 2, kind: input, shape index: {}]
  %s3 = inlined_call_operand.vmem [shape: f32[2,8,288], index: 3, kind: output, shape index: {}]
  %s4 = sld [smem:[#allocation0]]
  $region45: #{basic_conv2d.1} parent=0
    _
  %s6 = ssub.s32 1, %s4
  %s7 = scalar_select 0, %s6, %s4
  loop: start=0, step=1, limit=4
  $region2: #{basic_conv2d.1} parent=0 // loop_pre_header
    _
  $region3: #{basic_conv2d.1} parent=0 // loop_header
    %s9 = sphi 0, %s13
    %p10 = scmp.ge.s32.totalorder %s9, 4
    %s19 = sphi 0, %s21
    %s22 = sphi 0, %s19
    %s23 = sphi 0, %s22
    %s39 = sphi 0, %s23
    %s43 = sphi 0, %s43
    %s45 = sphi 0, %s43
    %s46 = sphi 0, %s45
    %s60 = sphi 0, %s46
    %s64 = sphi 0, %s64
    %s66 = sphi 0, %s64
    %s67 = sphi 0, %s66
    %s81 = sphi 0, %s67
    %s87 = sphi 0, %s89
    %s90 = sphi 0, %s87
    %s91 = sphi 0, %s90
    %s107 = sphi 0, %s91
  $region4: #{basic_conv2d.1} parent=0 // loop_header_branch
    %12 = sbr.rel (%p10) target = $region8
  $region5: #{basic_conv2d.1} parent=0 // loop_body
    %s14 = ssub.s32 %s9, 1
    %s15 = ssub.s32 %s9, 2
    %s16 = sadd.s32 %s9, 1
    %s17 = ssub.s32 %s9, %s16
    %p18 = scmp.eq.s32.totalorder %s17, 0
    %s20 = sadd.s32 %s19, 1
    %s21 = scalar_select %p18, %s19, %s20
    %p24 = pneg %p18
    %p25 = scmp.eq.s32.totalorder %s9, 1
    %p26 = por %p24, %p25
    %p27 = scmp.ne.s32.totalorder %s19, %s22
    %p28 = scmp.eq.s32.totalorder %s9, 0
    %p29 = por %p27, %p28
    %p30 = scmp.ne.s32.totalorder %s19, %s22
    %p31 = scmp.eq.s32.totalorder %s14, 1
    %p32 = por %p30, %p31
    %p33 = scmp.ne.s32.totalorder %s22, %s23
    %p34 = scmp.eq.s32.totalorder %s14, 0
    %p35 = por %p33, %p34
    %p36 = scmp.ne.s32.totalorder %s22, %s23
    %p37 = scmp.eq.s32.totalorder %s15, 1
    %p38 = por %p36, %p37
    %p40 = scmp.ne.s32.totalorder %s23, %s39
    %p41 = scmp.eq.s32.totalorder %s15, 0
    %p42 = por %p40, %p41
    %s44 = sadd.s32 %s43, 1
    %p47 = scmp.eq.s32.totalorder %s9, 1
    %p48 = scmp.ne.s32.totalorder %s43, %s45
    %p49 = scmp.eq.s32.totalorder %s9, 0
    %p50 = por %p48, %p49
    %p51 = scmp.ne.s32.totalorder %s43, %s45
    %p52 = scmp.eq.s32.totalorder %s14, 1
    %p53 = por %p51, %p52
    %p54 = scmp.ne.s32.totalorder %s45, %s46
    %p55 = scmp.eq.s32.totalorder %s14, 0
    %p56 = por %p54, %p55
    %p57 = scmp.ne.s32.totalorder %s45, %s46
    %p58 = scmp.eq.s32.totalorder %s15, 1
    %p59 = por %p57, %p58
    %p61 = scmp.ne.s32.totalorder %s46, %s60
    %p62 = scmp.eq.s32.totalorder %s15, 0
    %p63 = por %p61, %p62
    %s65 = sadd.s32 %s64, 1
    %p68 = scmp.eq.s32.totalorder %s9, 1
    %p69 = scmp.ne.s32.totalorder %s64, %s66
    %p70 = scmp.eq.s32.totalorder %s9, 0
    %p71 = por %p69, %p70
    %p72 = scmp.ne.s32.totalorder %s64, %s66
    %p73 = scmp.eq.s32.totalorder %s14, 1
    %p74 = por %p72, %p73
    %p75 = scmp.ne.s32.totalorder %s66, %s67
    %p76 = scmp.eq.s32.totalorder %s14, 0
    %p77 = por %p75, %p76
    %p78 = scmp.ne.s32.totalorder %s66, %s67
    %p79 = scmp.eq.s32.totalorder %s15, 1
    %p80 = por %p78, %p79
    %p82 = scmp.ne.s32.totalorder %s67, %s81
    %p83 = scmp.eq.s32.totalorder %s15, 0
    %p84 = por %p82, %p83
    %s85 = ssub.s32 %s9, %s16
    %p86 = scmp.eq.s32.totalorder %s85, 0
    %s88 = sadd.s32 %s87, 1
    %s89 = scalar_select %p86, %s87, %s88
    %p92 = pneg %p86
    %p93 = scmp.eq.s32.totalorder %s9, 1
    %p94 = por %p92, %p93
    %p95 = scmp.ne.s32.totalorder %s87, %s90
    %p96 = scmp.eq.s32.totalorder %s9, 0
    %p97 = por %p95, %p96
    %p98 = scmp.ne.s32.totalorder %s87, %s90
    %p99 = scmp.eq.s32.totalorder %s14, 1
    %p100 = por %p98, %p99
    %p101 = scmp.ne.s32.totalorder %s90, %s91
    %p102 = scmp.eq.s32.totalorder %s14, 0
    %p103 = por %p101, %p102
    %p104 = scmp.ne.s32.totalorder %s90, %s91
    %p105 = scmp.eq.s32.totalorder %s15, 1
    %p106 = por %p104, %p105
    %p108 = scmp.ne.s32.totalorder %s91, %s107
    %p109 = scmp.eq.s32.totalorder %s15, 0
    %p110 = por %p108, %p109
    %p111 = scmp.le.s32.totalorder 1, %s9
    %p112 = scmp.lt.s32.totalorder %s9, 3
    %p113 = pnand %p111, %p112
    %p114 = pneg %p113
    // Predicated region
    $region9: #{basic_conv2d.1} parent=5 // pred_check
      _
    $region10: #{basic_conv2d.1} parent=5 // pred_check_branch
      %116 = sbr.rel (%p113) target = $region12
    $region11: #{basic_conv2d.1} parent=5 // pred_region
      %s117 = ssub.s32 %s9, 1
      // Predicated region
      $region13: #{basic_conv2d.1} parent=11 // pred_check
        %p118 = pneg %p56
      $region14: #{basic_conv2d.1} parent=11 // pred_check_branch
        %120 = sbr.rel (%p118) target = $region16
      $region15: #{basic_conv2d.1} parent=11 // pred_region
        _
      $region16: #{basic_conv2d.1} parent=11 // pred_fallthru
        _
      // Predicated region
      $region17: #{basic_conv2d.1} parent=11 // pred_check
        %p121 = pneg %p77
      $region18: #{basic_conv2d.1} parent=11 // pred_check_branch
        %123 = sbr.rel (%p121) target = $region20
      $region19: #{basic_conv2d.1} parent=11 // pred_region
        _
      $region20: #{basic_conv2d.1} parent=11 // pred_fallthru
        _
    $region12: #{basic_conv2d.1} parent=5 // pred_fallthru
      _
    %p124 = scmp.lt.s32.totalorder %s9, 2
    // Predicated region
    $region21: #{basic_conv2d.1} parent=5 // pred_check
      %p125 = pneg %p124
    $region22: #{basic_conv2d.1} parent=5 // pred_check_branch
      %127 = sbr.rel (%p125) target = $region24
    $region23: #{basic_conv2d.1} parent=5 // pred_region
      // Predicated region
      $region25: #{basic_conv2d.1} parent=23 // pred_check
        %p128 = pneg %p29
      $region26: #{basic_conv2d.1} parent=23 // pred_check_branch
        %130 = sbr.rel (%p128) target = $region28
      $region27: #{basic_conv2d.1} parent=23 // pred_region
        %p131 = scmp.lt.s32.totalorder %s9, 1
        %s132 = scalar_select %p131, %s9, 1
        %s133 = smul.addr %s132, 3
        %s134 = smul.addr %s133, 4
        %s135 = scalar_lea.vmem %s0, %s134
      $region28: #{basic_conv2d.1} parent=23 // pred_fallthru
        _
    $region24: #{basic_conv2d.1} parent=5 // pred_fallthru
      _
    %p136 = scmp.le.s32.totalorder 1, %s9
    %p137 = scmp.lt.s32.totalorder %s9, 3
    %p138 = pnand %p136, %p137
    %p139 = pneg %p138
    // Predicated region
    $region29: #{basic_conv2d.1} parent=5 // pred_check
      _
    $region30: #{basic_conv2d.1} parent=5 // pred_check_branch
      %141 = sbr.rel (%p138) target = $region32
    $region31: #{basic_conv2d.1} parent=5 // pred_region
      %s142 = ssub.s32 %s9, 1
      %p143 = scmp.lt.s32.totalorder %s14, 1
      %s144 = scalar_select %p143, %s14, 1
      %s145 = smul.addr %s144, 3
      %s146 = smul.addr %s145, 4
      %s147 = scalar_lea.vmem %s0, %s146
      %p148 = pneg %p35
      %p149 = pneg %p32
      %p150 = pneg %p56
      %p151 = pneg %p53
      %p152 = pneg %p77
      %p153 = pneg %p74
      %p154 = pneg %p103
      %p155 = pneg %p100
      %p156 = scmp.lt.s32.totalorder %s14, 1
      %s157 = scalar_select %p156, %s14, 1
      %s158 = smul.addr %s157, 3
      %s159 = smul.addr %s158, 8
      %s160 = scalar_lea.vmem %s3, %s159
      %p161 = scmp.lt.s32.totalorder %s14, 1
      %s162 = scalar_select %p161, %s14, 1
      %s163 = smul.addr %s162, 3
      %s164 = smul.addr %s163, 4
      %s165 = scalar_lea.vmem %s0, %s164
      %p166 = scmp.lt.s32.totalorder %s14, 1
      %s167 = scalar_select %p166, %s14, 1
      %s168 = smul.addr %s167, 3
      %s169 = smul.addr %s168, 8
      %s170 = scalar_lea.vmem %s3, %s169
      %v172 = vld [vmem:[%s165] sm:$0xff]
      %v173 = vld [vmem:[%s165 + $0x8] sm:$0xf]
      %174 = vst [vmem:[#allocation2] sm:$0xff] %v172
      %vm175 = vcmask 257024
      %176 = vst.msk [vmem:[#allocation2 + $0x8] sm:$0xf] %vm175, %v173
      %v177 = vld [vmem:[%s165] sm:$0xff]
      %v178 = vld [vmem:[%s165 + $0x8] sm:$0xf]
      %181 = vrot.lane.b32.xlu0 %v177, 127
      %v182 = vpop.permute.xlu0 %181
      %183 = vrot.lane.b32.xlu0 %v178, 127
      %v184 = vpop.permute.xlu0 %183
      %v185 = vrot.slane %v182, 4
      %v186 = vrot.slane %v184, 4
      %vm187 = vcmask 1043456
      %v188 = vsel %vm187, %v185, %v186
      %vm189 = vcmask 1039360
      %v190 = vsel %vm189, %v182, %v188
      %193 = vst [vmem:[#allocation2 + $0xc] sm:$0xff] %v190
      %194 = vst.msk [vmem:[#allocation2 + $0x14] sm:$0xf] %vm175, %v184
      %v195 = vld [vmem:[%s165] sm:$0xff]
      %v196 = vld [vmem:[%s165 + $0x8] sm:$0xf]
      %199 = vrot.lane.b32.xlu0 %v195, 126
      %v200 = vpop.permute.xlu0 %199
      %201 = vrot.lane.b32.xlu0 %v196, 126
      %v202 = vpop.permute.xlu0 %201
      %v203 = vrot.slane %v200, 4
      %v204 = vrot.slane %v202, 4
      %v205 = vsel %vm187, %v203, %v204
      %vm206 = vcmask 1031168
      %v207 = vsel %vm206, %v200, %v205
      %210 = vst [vmem:[#allocation2 + $0x18] sm:$0xff] %v207
      %211 = vst.msk [vmem:[#allocation2 + $0x20] sm:$0xf] %vm175, %v202
      %v212 = vld [vmem:[%s165] sm:$0xff]
      %v213 = vld [vmem:[%s165 + $0x8] sm:$0xf]
      %216 = vrot.lane.b32.xlu0 %v212, 110
      %v217 = vpop.permute.xlu0 %216
      %218 = vrot.lane.b32.xlu0 %v213, 110
      %v219 = vpop.permute.xlu0 %218
      %v220 = vrot.slane %v217, 4
      %v221 = vrot.slane %v219, 4
      %v222 = vsel %vm187, %v220, %v221
      %vm223 = vcmask 900096
      %v224 = vsel %vm223, %v217, %v222
      %227 = vst [vmem:[#allocation2 + $0x24] sm:$0xff] %v224
      %228 = vst.msk [vmem:[#allocation2 + $0x2c] sm:$0xf] %vm175, %v219
      %v229 = vld [vmem:[%s165] sm:$0xff]
      %v230 = vld [vmem:[%s165 + $0x8] sm:$0xf]
      %233 = vrot.lane.b32.xlu0 %v229, 109
      %v234 = vpop.permute.xlu0 %233
      %235 = vrot.lane.b32.xlu0 %v230, 109
      %v236 = vpop.permute.xlu0 %235
      %v237 = vrot.slane %v234, 4
      %v238 = vrot.slane %v236, 4
      %v239 = vsel %vm187, %v237, %v238
      %vm240 = vcmask 891904
      %v241 = vsel %vm240, %v234, %v239
      %244 = vst [vmem:[#allocation2 + $0x30] sm:$0xff] %v241
      %245 = vst.msk [vmem:[#allocation2 + $0x38] sm:$0xf] %vm175, %v236
      %v246 = vld [vmem:[%s165] sm:$0xff]
      %v247 = vld [vmem:[%s165 + $0x8] sm:$0xf]
      %250 = vrot.lane.b32.xlu0 %v246, 108
      %v251 = vpop.permute.xlu0 %250
      %252 = vrot.lane.b32.xlu0 %v247, 108
      %v253 = vpop.permute.xlu0 %252
      %v254 = vrot.slane %v251, 4
      %v255 = vrot.slane %v253, 4
      %v256 = vsel %vm187, %v254, %v255
      %vm257 = vcmask 883712
      %v258 = vsel %vm257, %v251, %v256
      %261 = vst [vmem:[#allocation2 + $0x3c] sm:$0xff] %v258
      %262 = vst.msk [vmem:[#allocation2 + $0x44] sm:$0xf] %vm175, %v253
      %v263 = vld [vmem:[%s165] sm:$0xff]
      %v264 = vld [vmem:[%s165 + $0x8] sm:$0xf]
      %267 = vrot.lane.b32.xlu0 %v263, 92
      %v268 = vpop.permute.xlu0 %267
      %269 = vrot.lane.b32.xlu0 %v264, 92
      %v270 = vpop.permute.xlu0 %269
      %v271 = vrot.slane %v268, 4
      %v272 = vrot.slane %v270, 4
      %v273 = vsel %vm187, %v271, %v272
      %vm274 = vcmask 752640
      %v275 = vsel %vm274, %v268, %v273
      %278 = vst [vmem:[#allocation2 + $0x48] sm:$0xff] %v275
      %279 = vst.msk [vmem:[#allocation2 + $0x50] sm:$0xf] %vm175, %v270
      %v280 = vld [vmem:[%s165] sm:$0xff]
      %v281 = vld [vmem:[%s165 + $0x8] sm:$0xf]
      %284 = vrot.lane.b32.xlu0 %v280, 91
      %v285 = vpop.permute.xlu0 %284
      %286 = vrot.lane.b32.xlu0 %v281, 91
      %v287 = vpop.permute.xlu0 %286
      %v288 = vrot.slane %v285, 4
      %v289 = vrot.slane %v287, 4
      %v290 = vsel %vm187, %v288, %v289
      %vm291 = vcmask 744448
      %v292 = vsel %vm291, %v285, %v290
      %295 = vst [vmem:[#allocation2 + $0x54] sm:$0xff] %v292
      %296 = vst.msk [vmem:[#allocation2 + $0x5c] sm:$0xf] %vm175, %v287
      %v297 = vld [vmem:[%s165] sm:$0xff]
      %v298 = vld [vmem:[%s165 + $0x8] sm:$0xf]
      %301 = vrot.lane.b32.xlu0 %v297, 90
      %v302 = vpop.permute.xlu0 %301
      %303 = vrot.lane.b32.xlu0 %v298, 90
      %v304 = vpop.permute.xlu0 %303
      %v305 = vrot.slane %v302, 4
      %v306 = vrot.slane %v304, 4
      %v307 = vsel %vm187, %v305, %v306
      %vm308 = vcmask 736256
      %v309 = vsel %vm308, %v302, %v307
      %312 = vst [vmem:[#allocation2 + $0x60] sm:$0xff] %v309
      %313 = vst.msk [vmem:[#allocation2 + $0x68] sm:$0xf] %vm175, %v304
      %v314 = vld [vmem:[%s1] sm:$0xf]
      %v315 = vld [vmem:[#allocation2] sm:$0xff]
      %v316 = vld [vmem:[#allocation2 + $0x8] sm:$0xf]
      %v317 = vld [vmem:[#allocation2 + $0xc] sm:$0xff]
      %v318 = vld [vmem:[#allocation2 + $0x14] sm:$0xf]
      %v319 = vld [vmem:[#allocation2 + $0x18] sm:$0xff]
      %v320 = vld [vmem:[#allocation2 + $0x20] sm:$0xf]
      %v321 = vld [vmem:[#allocation2 + $0x24] sm:$0xff]
      %v322 = vld [vmem:[#allocation2 + $0x2c] sm:$0xf]
      %v323 = vld [vmem:[#allocation2 + $0x30] sm:$0xff]
      %v324 = vld [vmem:[#allocation2 + $0x38] sm:$0xf]
      %v325 = vld [vmem:[#allocation2 + $0x3c] sm:$0xff]
      %v326 = vld [vmem:[#allocation2 + $0x44] sm:$0xf]
      %v327 = vld [vmem:[#allocation2 + $0x48] sm:$0xff]
      %v328 = vld [vmem:[#allocation2 + $0x50] sm:$0xf]
      %v329 = vld [vmem:[#allocation2 + $0x54] sm:$0xff]
      %v330 = vld [vmem:[#allocation2 + $0x5c] sm:$0xf]
      %v331 = vld [vmem:[#allocation2 + $0x60] sm:$0xff]
      %v332 = vld [vmem:[#allocation2 + $0x68] sm:$0xf]
      %v333 = vld [vmem:[%s2] sm:$0xff]
      %335 = vset.pattern.permute.xlu0 0
      %336 = vperm.xlu0 %335, %v333
      %v337 = vpop.permute.xlu0 %336
      %v357 = vunpack.c.l.b16 %v315
      %v358 = vunpack.c.h.b16 %v315
      %v359 = vunpack.c.l.b16 %v316
      %v360 = vunpack.c.l.b16 %v317
      %v361 = vunpack.c.h.b16 %v317
      %v362 = vunpack.c.l.b16 %v318
      %v363 = vunpack.c.l.b16 %v319
      %v364 = vunpack.c.h.b16 %v319
      %v365 = vunpack.c.l.b16 %v320
      %v366 = vunpack.c.l.b16 %v321
      %v367 = vunpack.c.h.b16 %v321
      %v368 = vunpack.c.l.b16 %v322
      %v369 = vunpack.c.l.b16 %v323
      %v370 = vunpack.c.h.b16 %v323
      %v371 = vunpack.c.l.b16 %v324
      %v372 = vunpack.c.l.b16 %v325
      %v373 = vunpack.c.h.b16 %v325
      %v374 = vunpack.c.l.b16 %v326
      %v375 = vunpack.c.l.b16 %v327
      %v376 = vunpack.c.h.b16 %v327
      %v377 = vunpack.c.l.b16 %v328
      %v378 = vunpack.c.l.b16 %v329
      %v379 = vunpack.c.h.b16 %v329
      %v380 = vunpack.c.l.b16 %v330
      %v381 = vunpack.c.l.b16 %v331
      %v382 = vunpack.c.h.b16 %v331
      %v383 = vunpack.c.l.b16 %v332
      %v384 = vpack.c.b16 %v360, %v357
      %v385 = vpack.c.b16 %v361, %v358
      %v386 = vpack.c.b16 %v362, %v359
      %v387 = vpack.c.b16 %v366, %v363
      %v388 = vpack.c.b16 %v367, %v364
      %v389 = vpack.c.b16 %v368, %v365
      %v390 = vpack.c.b16 %v372, %v369
      %v391 = vpack.c.b16 %v373, %v370
      %v392 = vpack.c.b16 %v374, %v371
      %v393 = vpack.c.b16 %v378, %v375
      %v394 = vpack.c.b16 %v379, %v376
      %v395 = vpack.c.b16 %v380, %v377
      %v396 = vpack.c.b16 %v381, %v381
      %v397 = vpack.c.b16 %v382, %v382
      %v398 = vpack.c.b16 %v383, %v383
      %vm411 = vcmask 588800
      %v413 = vsel %vm411, %v314, 0
      %vm415 = vcmask 1043456
      %v417 = vsel %vm415, %v396, 0
      %v420 = vsel %vm415, %v397, 0
      %v423 = vsel %vm415, %v398, 0
      %425 = vmatprep.subr.bf16.mxu0 0
      %426 = vmatpush1.bf16.msra.mxu0 0
      %427 = vmatprep.subr.bf16.mxu0 0
      %428 = vmatpush1.bf16.msra.mxu0 0
      %429 = vmatprep.subr.bf16.mxu0 0
      %430 = vmatpush1.bf16.msra.mxu0 0
      %431 = vmatprep.subr.bf16.mxu0 %v420
      %432 = vmatpush1.bf16.msra.mxu0 %v417
      %433 = vmatprep.subr.bf16.mxu0 %v394
      %434 = vmatpush1.bf16.msra.mxu0 %v393
      %435 = vmatprep.subr.bf16.mxu0 %v391
      %436 = vmatpush1.bf16.msra.mxu0 %v390
      %437 = vmatprep.subr.bf16.mxu0 %v388
      %438 = vmatpush1.bf16.msra.mxu0 %v387
      %439 = vmatprep.subr.bf16.mxu0 %v385
      %440 = vmatpush1.bf16.msra.mxu0 %v384
      %441 = vmatprep.subr.bf16.mxu0 0
      %442 = vmatpush2.bf16.msra.mxu0 0
      %443 = vmatprep.subr.bf16.mxu0 0
      %444 = vmatpush2.bf16.msra.mxu0 0
      %445 = vmatprep.subr.bf16.mxu0 0
      %446 = vmatpush2.bf16.msra.mxu0 0
      %447 = vmatprep.subr.bf16.mxu0 0
      %448 = vmatpush2.bf16.msra.mxu0 0
      %449 = vmatprep.subr.bf16.mxu0 0
      %450 = vmatpush2.bf16.msra.mxu0 0
      %451 = vmatprep.subr.bf16.mxu0 0
      %452 = vmatpush2.bf16.msra.mxu0 0
      %453 = vmatprep.subr.bf16.mxu0 0
      %454 = vmatpush2.bf16.msra.mxu0 0
      %455 = vmatprep.subr.bf16.mxu0 0
      %456 = vmatpush2.bf16.msra.mxu0 0
      %457 = vmatprep.mubr.bf16.mxu0 0
      %458 = vmatmul.mubr.bf16.gmra.mxu0 %v413
      %v459 = vpop.f32.mrf.mxu0
      %v460 = vadd.f32 %v337, %v459
      %v461 = vpop.f32.mrf.mxu0
      %v462 = vadd.f32 %v337, %v461
      %v463 = vpop.f32.mrf.mxu0
      %v464 = vpop.f32.mrf.mxu0
      %465 = vdwg.mxu0
      %466 = vmatprep.subr.bf16.mxu0 0
      %467 = vmatpush1.bf16.msra.mxu0 0
      %468 = vmatprep.subr.bf16.mxu0 0
      %469 = vmatpush1.bf16.msra.mxu0 0
      %470 = vmatprep.subr.bf16.mxu0 0
      %471 = vmatpush1.bf16.msra.mxu0 0
      %472 = vmatprep.subr.bf16.mxu0 0
      %473 = vmatpush1.bf16.msra.mxu0 %v423
      %474 = vmatprep.subr.bf16.mxu0 0
      %475 = vmatpush1.bf16.msra.mxu0 %v395
      %476 = vmatprep.subr.bf16.mxu0 0
      %477 = vmatpush1.bf16.msra.mxu0 %v392
      %478 = vmatprep.subr.bf16.mxu0 0
      %479 = vmatpush1.bf16.msra.mxu0 %v389
      %480 = vmatprep.subr.bf16.mxu0 0
      %481 = vmatpush1.bf16.msra.mxu0 %v386
      %482 = vmatprep.subr.bf16.mxu0 0
      %483 = vmatpush2.bf16.msra.mxu0 0
      %484 = vmatprep.subr.bf16.mxu0 0
      %485 = vmatpush2.bf16.msra.mxu0 0
      %486 = vmatprep.subr.bf16.mxu0 0
      %487 = vmatpush2.bf16.msra.mxu0 0
      %488 = vmatprep.subr.bf16.mxu0 0
      %489 = vmatpush2.bf16.msra.mxu0 0
      %490 = vmatprep.subr.bf16.mxu0 0
      %491 = vmatpush2.bf16.msra.mxu0 0
      %492 = vmatprep.subr.bf16.mxu0 0
      %493 = vmatpush2.bf16.msra.mxu0 0
      %494 = vmatprep.subr.bf16.mxu0 0
      %495 = vmatpush2.bf16.msra.mxu0 0
      %496 = vmatprep.subr.bf16.mxu0 0
      %497 = vmatpush2.bf16.msra.mxu0 0
      %498 = vmatprep.mubr.bf16.mxu0 0
      %499 = vmatmul.mubr.bf16.gmra.mxu0 %v413
      %v500 = vpop.f32.mrf.mxu0
      %v501 = vadd.f32 %v337, %v500
      %v502 = vpop.f32.mrf.mxu0
      %v503 = vpop.f32.mrf.mxu0
      %v504 = vpop.f32.mrf.mxu0
      %505 = vdwg.mxu0
      %v506 = vmax.f32 %v460, 0.0
      %v507 = vmax.f32 %v462, 0.0
      %v508 = vmax.f32 %v501, 0.0
      %509 = vst [vmem:[%s170] sm:$0xff] %v506
      %510 = vst [vmem:[%s170 + $0x8] sm:$0xff] %v507
      %vm511 = vcmask 261120
      %512 = vst.msk [vmem:[%s170 + $0x10] sm:$0xff] %vm511, %v508
      %p513 = scmp.lt.s32.totalorder %s14, 1
      %s514 = scalar_select %p513, %s14, 1
      %s515 = smul.addr %s514, 3
      %s516 = smul.addr %s515, 8
      %s517 = scalar_lea.vmem %s3, %s516
      // Predicated region
      $region33: #{basic_conv2d.1} parent=31 // pred_check
        %p518 = pneg %p100
      $region34: #{basic_conv2d.1} parent=31 // pred_check_branch
        %520 = sbr.rel (%p518) target = $region36
      $region35: #{basic_conv2d.1} parent=31 // pred_region
        _
      $region36: #{basic_conv2d.1} parent=31 // pred_fallthru
        _
    $region32: #{basic_conv2d.1} parent=5 // pred_fallthru
      _
    %p521 = scmp.le.s32.totalorder 2, %s9
    // Predicated region
    $region37: #{basic_conv2d.1} parent=5 // pred_check
      %p522 = pneg %p521
    $region38: #{basic_conv2d.1} parent=5 // pred_check_branch
      %524 = sbr.rel (%p522) target = $region40
    $region39: #{basic_conv2d.1} parent=5 // pred_region
      %s525 = ssub.s32 %s9, 2
      // Predicated region
      $region41: #{basic_conv2d.1} parent=39 // pred_check
        %p526 = pneg %p106
      $region42: #{basic_conv2d.1} parent=39 // pred_check_branch
        %528 = sbr.rel (%p526) target = $region44
      $region43: #{basic_conv2d.1} parent=39 // pred_region
        %p529 = scmp.lt.s32.totalorder %s15, 1
        %s530 = scalar_select %p529, %s15, 1
        %s531 = smul.addr %s530, 3
        %s532 = smul.addr %s531, 8
        %s533 = scalar_lea.vmem %s3, %s532
      $region44: #{basic_conv2d.1} parent=39 // pred_fallthru
        _
    $region40: #{basic_conv2d.1} parent=5 // pred_fallthru
      _
  $region6: #{basic_conv2d.1} parent=0 // loop_footer
    %s13 = sadd.s32 1, %s9
  $region7: #{basic_conv2d.1} parent=0 // loop_footer_branch
    %8 = sbr.rel target = $region3
  $region8: #{basic_conv2d.1} parent=0 // loop_exit
    _

</llo_original>
